<compile_context>
chip_gen: v6e
topology: v6e:2x2x1
jax: 0.10.0
libtpu: 0.0.40
codegen_flags: <defaults>
</compile_context>

<pallas_src>
import jax
import jax.numpy as jnp
from jax.experimental import pallas as pl
from jax.experimental.pallas import tpu as pltpu


def _make_probe_kernel(k, d):
    """Kernel over x tile (TM, k*d), weight row (1, k*d), SMEM bias (1,1) -> (TM, k)."""

    def kernel(x_ref, w_ref, b_ref, o_ref):
        # Upcast after load: HBM bytes stay in the input's native dtype.
        x = x_ref[...].astype(jnp.float32)
        prod = x * w_ref[...]                                   # VPU broadcast multiply
        # Per-D-segment lane reduce (XLU). k is a small static int (<= 16).
        cols = [
            jnp.sum(prod[:, s * d:(s + 1) * d], axis=-1, keepdims=True)
            for s in range(k)
        ]
        z = cols[0] if k == 1 else jnp.concatenate(cols, axis=-1)   # (TM, k)
        z = z + b_ref[0, 0]
        # sigmoid = 1 / (1 + exp(-z)); exp -> EUP, exact reciprocal for 1e-5 accuracy.
        o_ref[...] = pl.reciprocal(1.0 + jnp.exp(-z)).astype(o_ref.dtype)

    return kernel


def _choose_tile_rows(rows, row_bytes, itemsize):
    """Pick the batch tile (in packed rows) for the x BlockSpec."""
    sub = 16 if itemsize < 4 else 8                 # sublane packing granularity
    target_bytes = 2 * 1024 * 1024                  # ~2 MiB per x tile DMA
    vmem_budget = 12 * 1024 * 1024                  # 2 double-buffered x tiles fit the
                                                    # default scoped VMEM on v5e/v6e/v7x
    tm = min(8192, max(256, target_bytes // max(row_bytes, 1)))
    tm = min(tm, vmem_budget // (2 * max(row_bytes, 1)))
    if rows >= 8 * 256:                             # keep >=8 tiles so both v7x TCs get work
        tm = min(tm, pl.cdiv(rows, 8))
    tm = max(sub, (tm // sub) * sub)
    if tm >= rows:
        return int(rows)                            # single full block (block dim == array dim)
    return int(tm)


def probe_forward(x, weight, bias):
    """sigmoid(x @ weight + bias).  x: (B, D), weight: any shape with D elems, bias scalar."""
    B, D = x.shape
    in_dtype = x.dtype
    itemsize = jnp.dtype(in_dtype).itemsize

    # ---- lane-packing factor k: pack k batch rows into one 128-lane-dense row ----
    k = 1
    if D < 128:
        k = max(1, 128 // D)
        while k > 1 and B % k != 0:
            k //= 2

    rows, cols = B // k, k * D
    x_in = x.reshape(rows, cols)                                  # free row-major reshape
    w_row = jnp.asarray(weight, jnp.float32).reshape(1, D)
    w_in = jnp.tile(w_row, (1, k)) if k > 1 else w_row            # (1, k*D) lane-dense
    b_in = jnp.reshape(jnp.asarray(bias, jnp.float32), (1, 1))    # scalar bias in SMEM

    tm = _choose_tile_rows(rows, cols * itemsize, itemsize)
    grid = (pl.cdiv(rows, tm),)                                   # no padding; edge block partial

    cost = pl.CostEstimate(
        flops=2 * B * D,
        transcendentals=B,
        bytes_accessed=B * D * itemsize + B * itemsize + (k * D + 1) * 4,
    )

    out = pl.pallas_call(
        _make_probe_kernel(k, D),
        out_shape=jax.ShapeDtypeStruct((rows, k), in_dtype),
        grid_spec=pltpu.PrefetchScalarGridSpec(
            num_scalar_prefetch=0,
            grid=grid,
            in_specs=[
                pl.BlockSpec((tm, cols), lambda i: (i, 0)),       # x: batch-tiled, pipelined
                pl.BlockSpec((1, cols), lambda i: (0, 0)),        # weight: constant block, no re-DMA
                pl.BlockSpec(memory_space=pltpu.SMEM),            # bias scalar in SMEM
            ],
            out_specs=pl.BlockSpec((tm, k), lambda i: (i, 0)),
        ),
        compiler_params=pltpu.CompilerParams(
            dimension_semantics=("parallel",),                    # v7x: shard batch tiles across 2 TCs
        ),
        cost_estimate=cost,
    )(x_in, w_in, b_in)

    return out.reshape(B, 1)                                      # free row-major reshape back


if __name__ == "__main__":
    key = jax.random.PRNGKey(0)
    kx, kw, kb = jax.random.split(key, 3)

    B, D = 8, 32  # batch=8, input_size=32 (small, consistent with the module)

    x = jax.random.normal(kx, (B, D), dtype=jnp.float32)

    # Parameter init mimicking torch.nn.Linear's uniform(-1/sqrt(D), 1/sqrt(D))
    bound = 1.0 / (D ** 0.5)
    weight = jax.random.uniform(kw, (D, 1), minval=-bound, maxval=bound, dtype=jnp.float32)
    bias = jax.random.uniform(kb, (), minval=-bound, maxval=bound, dtype=jnp.float32)

    y = probe_forward(x, weight, bias)
    y = jax.block_until_ready(y)

    # Exact-f32 reference (HIGHEST so the reference matmul is not bf16-rounded on the MXU).
    y_ref = jax.nn.sigmoid(
        jnp.dot(x, weight, precision=jax.lax.Precision.HIGHEST) + bias
    )
    assert y.shape == (B, 1)
    assert jnp.allclose(y, y_ref, atol=1e-5, rtol=1e-5), "mismatch vs reference"

    print("KERNEL_OK")
</pallas_src>

<mosaic_0001>
module attributes {stable_mosaic.version = 11 : i64} {
  func.func @kernel(%arg0: i32, %arg1: memref<2x128xf32, #tpu.memory_space<vmem>>, %arg2: memref<1x128xf32, #tpu.memory_space<vmem>>, %arg3: memref<1x1xf32, #tpu.memory_space<smem>>, %arg4: memref<2x4xf32, #tpu.memory_space<vmem>>) attributes {dimension_semantics = [#tpu.dimension_semantics<parallel>], iteration_bounds = array<i64: 1>, scalar_prefetch = 0 : i64, scratch_operands = 0 : i64, tpu.core_type = #tpu.core_type<tc>, window_params = [{transform_indices = @transform_0, window_bounds = array<i64: 2, 128>}, {pipeline_mode = #tpu.pipeline_mode<synchronous>, transform_indices = @transform_1, window_bounds = array<i64: 1, 128>}, {transform_indices = @transform_2, window_bounds = array<i64: 1, 1>}, {transform_indices = @transform_3, window_bounds = array<i64: 2, 4>}]} {
    %c0 = arith.constant 0 : index
    %c0_0 = arith.constant 0 : index
    %0 = vector.load %arg1[%c0, %c0_0] : memref<2x128xf32, #tpu.memory_space<vmem>>, vector<2x128xf32>
    %c0_1 = arith.constant 0 : index
    %c0_2 = arith.constant 0 : index
    %1 = vector.load %arg2[%c0_1, %c0_2] : memref<1x128xf32, #tpu.memory_space<vmem>>, vector<1x128xf32>
    %2 = vector.broadcast %1 : vector<1x128xf32> to vector<2x128xf32>
    %3 = arith.mulf %0, %2 : vector<2x128xf32>
    %4 = vector.extract_strided_slice %3 {offsets = [0, 0], sizes = [2, 32], strides = [1, 1]} : vector<2x128xf32> to vector<2x32xf32>
    %cst = arith.constant dense<0.000000e+00> : vector<2xf32>
    %5 = vector.multi_reduction <add>, %4, %cst [1] : vector<2x32xf32> to vector<2xf32>
    %6 = vector.shape_cast %5 : vector<2xf32> to vector<2x1xf32>
    %7 = vector.extract_strided_slice %3 {offsets = [0, 32], sizes = [2, 32], strides = [1, 1]} : vector<2x128xf32> to vector<2x32xf32>
    %cst_3 = arith.constant dense<0.000000e+00> : vector<2xf32>
    %8 = vector.multi_reduction <add>, %7, %cst_3 [1] : vector<2x32xf32> to vector<2xf32>
    %9 = vector.shape_cast %8 : vector<2xf32> to vector<2x1xf32>
    %10 = vector.extract_strided_slice %3 {offsets = [0, 64], sizes = [2, 32], strides = [1, 1]} : vector<2x128xf32> to vector<2x32xf32>
    %cst_4 = arith.constant dense<0.000000e+00> : vector<2xf32>
    %11 = vector.multi_reduction <add>, %10, %cst_4 [1] : vector<2x32xf32> to vector<2xf32>
    %12 = vector.shape_cast %11 : vector<2xf32> to vector<2x1xf32>
    %13 = vector.extract_strided_slice %3 {offsets = [0, 96], sizes = [2, 32], strides = [1, 1]} : vector<2x128xf32> to vector<2x32xf32>
    %cst_5 = arith.constant dense<0.000000e+00> : vector<2xf32>
    %14 = vector.multi_reduction <add>, %13, %cst_5 [1] : vector<2x32xf32> to vector<2xf32>
    %15 = vector.shape_cast %14 : vector<2xf32> to vector<2x1xf32>
    %16 = tpu.concatenate %6, %9, %12, %15 in 1 : vector<2x1xf32>, vector<2x1xf32>, vector<2x1xf32>, vector<2x1xf32> -> vector<2x4xf32>
    %c0_6 = arith.constant 0 : index
    %c0_7 = arith.constant 0 : index
    %17 = memref.load %arg3[%c0_6, %c0_7] : memref<1x1xf32, #tpu.memory_space<smem>>
    %18 = vector.broadcast %17 : f32 to vector<2x4xf32>
    %19 = arith.addf %16, %18 : vector<2x4xf32>
    %cst_8 = arith.constant 0.000000e+00 : f32
    %20 = vector.broadcast %cst_8 : f32 to vector<2x4xf32>
    %21 = arith.subf %20, %19 : vector<2x4xf32>
    %22 = math.exp %21 : vector<2x4xf32>
    %cst_9 = arith.constant 1.000000e+00 : f32
    %23 = vector.broadcast %cst_9 : f32 to vector<2x4xf32>
    %24 = arith.addf %23, %22 : vector<2x4xf32>
    %25 = tpu.reciprocal %24 : vector<2x4xf32> -> vector<2x4xf32>
    %c0_10 = arith.constant 0 : index
    %c0_11 = arith.constant 0 : index
    %26 = vector.load %arg4[%c0_10, %c0_11] : memref<2x4xf32, #tpu.memory_space<vmem>>, vector<2x4xf32>
    tpu.vector_store %arg4[%c0_10, %c0_11], %25 {strides = array<i32>} : memref<2x4xf32, #tpu.memory_space<vmem>>, vector<2x4xf32>,
    return
  }
  func.func @transform_0(%arg0: i32) -> (i32, i32) {
    %c0_i32 = arith.constant 0 : i32
    %c0_i32_0 = arith.constant 0 : i32
    return %arg0, %c0_i32 : i32, i32
  }
  func.func @transform_1(%arg0: i32) -> (i32, i32) {
    %c0_i32 = arith.constant 0 : i32
    %c0_i32_0 = arith.constant 0 : i32
    %c0_i32_1 = arith.constant 0 : i32
    return %c0_i32, %c0_i32_0 : i32, i32
  }
  func.func @transform_2(%arg0: i32) -> (i32, i32) {
    %c0_i32 = arith.constant 0 : i32
    %c0_i32_0 = arith.constant 0 : i32
    %c0_i32_1 = arith.constant 0 : i32
    return %c0_i32, %c0_i32_0 : i32, i32
  }
  func.func @transform_3(%arg0: i32) -> (i32, i32) {
    %c0_i32 = arith.constant 0 : i32
    %c0_i32_0 = arith.constant 0 : i32
    return %arg0, %c0_i32 : i32, i32
  }
}

</mosaic_0001>

<llo_original>
// kernel: tpu_custom_call.1
$region0: #{tpu_custom_call.1}
  #allocation0 [shape = 'u32[]', space=smem, size = 0x4, offset = 0x4, fixed_abs, tag = 'smem constant byte address 0x4 - core index']
  #allocation1 [shape = 'u32[144,128]{1,0:T(1,128)}', space=vmem, size = 0x12000, scoped, tag = 'internal scratch']
  #allocation2 [shape = 'f32[1,1]{1,0:T(1,128)S(6)}', space=smem, size = 0x200, scoped, tag = 'scoped memory for tpu_custom_call.1']
  %s0 = inlined_call_operand.vmem [shape: f32[2,128], index: 0, kind: input, shape index: {}]
  %s1 = inlined_call_operand.vmem [shape: f32[1,128], index: 1, kind: input, shape index: {}]
  %s2 = inlined_call_operand.<no memory space> [shape: f32[1,1], index: 2, kind: input, shape index: {}]
  %s3 = inlined_call_operand.hbm [shape: f32[2,4], index: 3, kind: output, shape index: {}]
  %s4 = sld [smem:[#allocation0]]
  $region22: #{tpu_custom_call.1} parent=0
    _
  %s6 = ssub.s32 1, %s4
  %s7 = scalar_select 0, %s6, %s4
  %8 = sst [smem:[#allocation2]] %s2
  $region1: #{tpu_custom_call.1} parent=0
    #allocation3 [shape = 'u8[1024]{0}', space=vmem, size = 0x400, scoped, tag = 'output window, operand 0, single buffered']
    #allocation4 [shape = 's32[1]{0}', space=sflag, size = 0x4, scoped, tag = 'scoped memory for tpu_custom_call.1']
    %9 = vsyncpa [#allocation4], 0
    // Predicated region
    $region2: #{tpu_custom_call.1} parent=1 // pred_check
      _
    $region3: #{tpu_custom_call.1} parent=1 // pred_check_branch
      %11 = sbr.rel (0) target = $region5
    $region4: #{tpu_custom_call.1} parent=1 // pred_region
      _
    $region5: #{tpu_custom_call.1} parent=1 // pred_fallthru
      _
    // Predicated region
    $region6: #{tpu_custom_call.1} parent=1 // pred_check
      _
    $region7: #{tpu_custom_call.1} parent=1 // pred_check_branch
      %13 = sbr.rel (0) target = $region9
    $region8: #{tpu_custom_call.1} parent=1 // pred_region
      _
    $region9: #{tpu_custom_call.1} parent=1 // pred_fallthru
      _
    // Predicated region
    $region10: #{tpu_custom_call.1} parent=1 // pred_check
      _
    $region11: #{tpu_custom_call.1} parent=1 // pred_check_branch
      %15 = sbr.rel (0) target = $region13
    $region12: #{tpu_custom_call.1} parent=1 // pred_region
      _
    $region13: #{tpu_custom_call.1} parent=1 // pred_fallthru
      _
    %v16 = vld [vmem:[%s0] sm:$0x3]
    %v17 = vld [vmem:[%s1] sm:$0x1]
    %v19 = vlaneseq
    %v20 = vshrl.u32 %v19, 7
    %v21 = vsub.s32 0, %v20
    %v22 = vrot.slane %v17, %v21
    %v24 = vmul.f32 %v16, %v22
    %vm25 = vcmask 254976
    %v26 = vsel %vm25, %v24, 0.0
    %27 = vadd.xlane.f32.xlu0 %v26
    %v28 = vpop.xlane.xlu0 %27
    %30 = vrot.lane.b32.xlu0 %v24, 96
    %v31 = vpop.permute.xlu0 %30
    %v33 = vsel %vm25, %v31, 0.0
    %34 = vadd.xlane.f32.xlu0 %v33
    %v35 = vpop.xlane.xlu0 %34
    %36 = vrot.lane.b32.xlu0 %v24, 64
    %v37 = vpop.permute.xlu0 %36
    %v39 = vsel %vm25, %v37, 0.0
    %40 = vadd.xlane.f32.xlu0 %v39
    %v41 = vpop.xlane.xlu0 %40
    %42 = vrot.lane.b32.xlu0 %v24, 32
    %v43 = vpop.permute.xlu0 %42
    %v45 = vsel %vm25, %v43, 0.0
    %46 = vadd.xlane.f32.xlu0 %v45
    %v47 = vpop.xlane.xlu0 %46
    %vm48 = vcmask 7168
    %v49 = vsel %vm48, %v28, %v35
    %vm50 = vcmask 15360
    %v51 = vsel %vm50, %v49, %v41
    %vm52 = vcmask 23552
    %v53 = vsel %vm52, %v51, %v47
    %s54 = sld [smem:[#allocation2]]
    %v55 = vstv %s54
    %v56 = vadd.f32 %v53, %v55
    %v57 = vsub.f32 0.0, %v56
    %v58 = vmul.f32 %v57, 1.442695
    %v59 = vpow.pop %v58
    %v60 = vadd.f32 %v59, 1.0
    %v61 = vrcp.pop %v60
    %vm62 = vcmask 25600
    %63 = vst.msk [vmem:[#allocation3] sm:$0x3] %vm62, %v61
    // Predicated region
    $region14: #{tpu_custom_call.1} parent=1 // pred_check
      _
    $region15: #{tpu_custom_call.1} parent=1 // pred_check_branch
      %65 = sbr.rel (0) target = $region17
    $region16: #{tpu_custom_call.1} parent=1 // pred_region
      %s67 = ssub.s32 32, 32
      %68 = vsyncadd [#allocation4], %s67
      %s70 = sshll.u32 [#allocation3], 4
      %s71 = int_to_ptr.vmem [resolvable:$true] %s70
      %73 = dma.vmem_to_hbm [thread:$0]  %s71, 32, %s3, [#allocation4]
    $region17: #{tpu_custom_call.1} parent=1 // pred_fallthru
      _
    // Predicated region
    $region18: #{tpu_custom_call.1} parent=1 // pred_check
      _
    $region19: #{tpu_custom_call.1} parent=1 // pred_check_branch
      %75 = sbr.rel (0) target = $region21
    $region20: #{tpu_custom_call.1} parent=1 // pred_region
      %76 = dma.done [#allocation4], 32
    $region21: #{tpu_custom_call.1} parent=1 // pred_fallthru
      _
    %77 = vsyncpa [#allocation4], 1

</llo_original>
